<compile_context>
chip_gen: v7x
topology: tpu7x:2x2x1
jax: 0.10.0
libtpu: 0.0.40
codegen_flags: <defaults>
</compile_context>

<pallas_src>
import jax
import jax.numpy as jnp
import numpy as np
from jax.experimental import pallas as pl
from jax.experimental.pallas import tpu as pltpu


def _round_up(a, b):
    return (a + b - 1) // b * b


# --------------------------------------------------------------------------------- kernel ---

def gate_kernel(x_ref, s_ref, st_ref, w_ref, b_ref, l0_ref, o_ref):
    x = x_ref[...]                                       # (tn, Dp) f32, lane-dense
    S = s_ref[...]                                       # (Dp, Fp) 0/1 segment matrix

    # --- invariant(): two matmuls sharing the same stationary RHS (S) ---------------------
    lin_proj = jnp.dot(x, S, preferred_element_type=jnp.float32)        # (tn, Fp)
    sq_proj = jnp.dot(x * x, S, preferred_element_type=jnp.float32)     # (tn, Fp)
    l0 = l0_ref[...]                                     # (1, Fp); 1.0 where channel has l == 0
    # TODO(synk): torch_gauge's invariant() may add a small eps before sqrt; omitted (fwd only).
    x_inv = jnp.where(l0 != 0.0, lin_proj, jnp.sqrt(sq_proj))           # (tn, Fp)

    # --- Linear + SiLU ----------------------------------------------------------------------
    pre = jnp.dot(x_inv, w_ref[...], preferred_element_type=jnp.float32) + b_ref[...]
    g = pre * jax.nn.sigmoid(pre)                                       # silu (sigmoid on EUP)

    # --- scalar_mul(): broadcast per-channel gate back to components via g @ S^T -------------
    scale = jnp.dot(g, st_ref[...], preferred_element_type=jnp.float32)  # (tn, Dp)
    o_ref[...] = (x * scale).astype(o_ref.dtype)


# ----------------------------------------------------------------------------- param setup ---

def build_metadata_mats(metadata):
    """metadata[l] = number of channels of degree l. Returns (D, F, S[D,F], l0_mask[1,F])."""
    F = int(sum(metadata))
    D = int(sum((2 * l + 1) * c for l, c in enumerate(metadata)))
    S = np.zeros((D, F), dtype=np.float32)
    l0 = np.zeros((1, F), dtype=np.float32)
    comp = 0
    ch = 0
    for l, c in enumerate(metadata):
        for _ in range(c):
            for _m in range(2 * l + 1):
                S[comp, ch] = 1.0
                comp += 1
            if l == 0:
                l0[0, ch] = 1.0
            ch += 1
    return D, F, S, l0


def prepare_gate_params(metadata, weight, bias):
    """Pad / transpose all parameters ONCE at setup time (not per forward call)."""
    D, F, S, l0 = build_metadata_mats(metadata)
    Dp = _round_up(D, 128)            # lane-dense last dims
    Fp = _round_up(F, 128)
    Sp = np.zeros((Dp, Fp), np.float32)
    Sp[:D, :F] = S
    Wp = np.zeros((Fp, Fp), np.float32)
    Wp[:F, :F] = np.asarray(weight).T                    # forward uses x_inv @ W.T + b
    bp = np.zeros((1, Fp), np.float32)
    bp[:, :F] = np.asarray(bias).reshape(1, F)
    l0p = np.zeros((1, Fp), np.float32)
    l0p[:, :F] = l0
    return {
        "D": D, "F": F, "Dp": Dp, "Fp": Fp,
        "S": jnp.asarray(Sp),
        "St": jnp.asarray(np.ascontiguousarray(Sp.T)),   # explicit transpose, built once
        "Wt": jnp.asarray(Wp),
        "b": jnp.asarray(bp),
        "l0": jnp.asarray(l0p),
    }


def pad_activations(x, Dp):
    """Pad the component axis once at the model boundary; keep this layout across layers."""
    N, D = x.shape
    if D == Dp:
        return x
    return jnp.concatenate([x, jnp.zeros((N, Dp - D), x.dtype)], axis=1)


# --------------------------------------------------------------------------------- forward ---

_TARGET_VMEM_BYTES = 20 * 1024 * 1024   # footprint target for tn sizing (fits all generations)
_VMEM_LIMIT_BYTES = 48 * 1024 * 1024    # > v5e 16 MiB scoped default, < v7x 64 MiB physical


def _pick_tn(N, Dp, Fp, budget_bytes=_TARGET_VMEM_BYTES):
    # Full accounting: double-buffered x + out pipeline tiles (4*tn*Dp), in-kernel
    # intermediates (x*x, scale ~ 2*tn*Dp; lin/sq/x_inv/pre/g ~ 5*tn*Fp), plus the
    # single-buffered loop-invariant operands (S, S^T, W^T, bias, l0).
    invariant_bytes = (2 * Dp * Fp + Fp * Fp + 2 * Fp) * 4
    per_row_bytes = (6 * Dp + 5 * Fp) * 4
    avail = max(budget_bytes - invariant_bytes, 8 * per_row_bytes)
    tn_cap = max(8, min(1024, (avail // per_row_bytes) // 8 * 8))
    # Prefer >= 2 grid steps, an even step count and no tiny trailing tile (v7x megacore).
    steps = max(2, pl.cdiv(N, tn_cap))
    if steps % 2 == 1:
        steps += 1
    tn = max(8, _round_up(pl.cdiv(N, steps), 8))
    return min(tn, tn_cap)


def gate_forward(x_padded, params, *, tn=None):
    """x_padded: (N, Dp) f32 with the component axis already padded to params['Dp'].
    Returns (N, Dp) in the same padded layout (slice [:, :D] only at the model boundary)."""
    N, Dp = x_padded.shape
    Fp = params["Fp"]
    assert Dp == params["Dp"]
    if tn is None:
        tn = _pick_tn(N, Dp, Fp)
    tn = max(8, _round_up(tn, 8))

    grid = (pl.cdiv(N, tn),)          # ragged last tile handled by masked OOB stores
    vmem = pltpu.MemorySpace.VMEM
    return pl.pallas_call(
        gate_kernel,
        out_shape=jax.ShapeDtypeStruct((N, Dp), x_padded.dtype),
        grid_spec=pltpu.PrefetchScalarGridSpec(
            num_scalar_prefetch=0,
            grid=grid,
            in_specs=[
                pl.BlockSpec((tn, Dp), lambda i: (i, 0)),   # x row tile (lane-dense, pipelined)
                pl.BlockSpec(memory_space=vmem),            # S   (Dp, Fp): fetched once
                pl.BlockSpec(memory_space=vmem),            # S^T (Fp, Dp): fetched once
                pl.BlockSpec(memory_space=vmem),            # W^T (Fp, Fp)
                pl.BlockSpec(memory_space=vmem),            # bias (1, Fp)
                pl.BlockSpec(memory_space=vmem),            # l=0 channel mask (1, Fp)
            ],
            out_specs=pl.BlockSpec((tn, Dp), lambda i: (i, 0)),
        ),
        compiler_params=pltpu.CompilerParams(
            dimension_semantics=("parallel",),
            vmem_limit_bytes=_VMEM_LIMIT_BYTES,
        ),
    )(x_padded, params["S"], params["St"], params["Wt"], params["b"], params["l0"])


# --------------------------------------------------------------------------------- testing ---

def reference_forward(x, S, l0_mask, weight_t, bias):
    lin_proj = x @ S
    sq_proj = (x * x) @ S
    x_inv = jnp.where(l0_mask != 0.0, lin_proj, jnp.sqrt(sq_proj))
    pre = x_inv @ weight_t + bias
    g = jax.nn.silu(pre)
    return x * (g @ S.T)


if __name__ == "__main__":
    # Small SphericalTensor: 8 channels of l=0, 4 of l=1, 4 of l=2 -> num_features = 16, D = 40.
    metadata = (8, 4, 4)
    N = 20  # number of nodes; deliberately NOT a multiple of the row tile (exercises ragged tile)

    key = jax.random.PRNGKey(0)
    kx, kw, kb = jax.random.split(key, 3)

    D = int(sum((2 * l + 1) * c for l, c in enumerate(metadata)))
    F = int(sum(metadata))
    # nn.Linear(num_features, num_features) default-style init (deterministic here).
    bound = 1.0 / np.sqrt(F)
    weight = jax.random.uniform(kw, (F, F), minval=-bound, maxval=bound, dtype=jnp.float32)
    bias = jax.random.uniform(kb, (1, F), minval=-bound, maxval=bound, dtype=jnp.float32)

    params = prepare_gate_params(metadata, weight, bias)     # padded once at setup

    x = jax.random.normal(kx, (N, D), dtype=jnp.float32)
    xp = pad_activations(x, params["Dp"])                    # pad component axis once at boundary

    out = gate_forward(xp, params)
    out = jax.block_until_ready(out)

    # Verify against a pure-JAX reference on the unpadded view.
    S_ref = params["S"][:D, :F]
    l0_ref = params["l0"][:, :F]
    Wt_ref = params["Wt"][:F, :F]
    ref = reference_forward(x, S_ref, l0_ref, Wt_ref, bias)
    np.testing.assert_allclose(np.asarray(out)[:N, :D], np.asarray(ref), rtol=1e-5, atol=1e-5)

    print("KERNEL_OK")
</pallas_src>

<mosaic_0001>
module attributes {stable_mosaic.version = 11 : i64} {
  func.func @gate_kernel(%arg0: i32, %arg1: memref<16x128xf32, #tpu.memory_space<vmem>>, %arg2: memref<128x128xf32, #tpu.memory_space<vmem>>, %arg3: memref<128x128xf32, #tpu.memory_space<vmem>>, %arg4: memref<128x128xf32, #tpu.memory_space<vmem>>, %arg5: memref<1x128xf32, #tpu.memory_space<vmem>>, %arg6: memref<1x128xf32, #tpu.memory_space<vmem>>, %arg7: memref<16x128xf32, #tpu.memory_space<vmem>>) attributes {dimension_semantics = [#tpu.dimension_semantics<parallel>], iteration_bounds = array<i64: 2>, scalar_prefetch = 0 : i64, scratch_operands = 0 : i64, tpu.core_type = #tpu.core_type<tc>, window_params = [{transform_indices = @transform_0, window_bounds = array<i64: 16, 128>}, {pipeline_mode = #tpu.pipeline_mode<synchronous>, transform_indices = @transform_1, window_bounds = array<i64: 128, 128>}, {pipeline_mode = #tpu.pipeline_mode<synchronous>, transform_indices = @transform_2, window_bounds = array<i64: 128, 128>}, {pipeline_mode = #tpu.pipeline_mode<synchronous>, transform_indices = @transform_3, window_bounds = array<i64: 128, 128>}, {pipeline_mode = #tpu.pipeline_mode<synchronous>, transform_indices = @transform_4, window_bounds = array<i64: 1, 128>}, {pipeline_mode = #tpu.pipeline_mode<synchronous>, transform_indices = @transform_5, window_bounds = array<i64: 1, 128>}, {transform_indices = @transform_6, window_bounds = array<i64: 16, 128>}]} {
    %c0 = arith.constant 0 : index
    %c0_0 = arith.constant 0 : index
    %0 = vector.load %arg1[%c0, %c0_0] : memref<16x128xf32, #tpu.memory_space<vmem>>, vector<16x128xf32>
    %c0_1 = arith.constant 0 : index
    %c0_2 = arith.constant 0 : index
    %1 = vector.load %arg2[%c0_1, %c0_2] : memref<128x128xf32, #tpu.memory_space<vmem>>, vector<128x128xf32>
    %cst = arith.constant dense<0.000000e+00> : vector<16x128xf32>
    %2 = tpu.matmul %0, %1, %cst {dimension_numbers = #tpu.dot_dimension_numbers<[1], [0], [0], [1], [0, 0, 1, 1], [], []>} : vector<16x128xf32>, vector<128x128xf32>, vector<16x128xf32> -> vector<16x128xf32>
    %3 = arith.mulf %0, %0 : vector<16x128xf32>
    %cst_3 = arith.constant dense<0.000000e+00> : vector<16x128xf32>
    %4 = tpu.matmul %3, %1, %cst_3 {dimension_numbers = #tpu.dot_dimension_numbers<[1], [0], [0], [1], [0, 0, 1, 1], [], []>} : vector<16x128xf32>, vector<128x128xf32>, vector<16x128xf32> -> vector<16x128xf32>
    %c0_4 = arith.constant 0 : index
    %c0_5 = arith.constant 0 : index
    %5 = vector.load %arg6[%c0_4, %c0_5] : memref<1x128xf32, #tpu.memory_space<vmem>>, vector<1x128xf32>
    %cst_6 = arith.constant 0.000000e+00 : f32
    %6 = vector.broadcast %cst_6 : f32 to vector<1x128xf32>
    %7 = arith.cmpf one, %5, %6 : vector<1x128xf32>
    %8 = math.sqrt %4 : vector<16x128xf32>
    %9 = vector.shape_cast %7 : vector<1x128xi1> to vector<1x128xi1>
    %10 = vector.broadcast %9 : vector<1x128xi1> to vector<16x128xi1>
    %11 = arith.select %10, %2, %8 : vector<16x128xi1>, vector<16x128xf32>
    %c0_7 = arith.constant 0 : index
    %c0_8 = arith.constant 0 : index
    %12 = vector.load %arg4[%c0_7, %c0_8] : memref<128x128xf32, #tpu.memory_space<vmem>>, vector<128x128xf32>
    %cst_9 = arith.constant dense<0.000000e+00> : vector<16x128xf32>
    %13 = tpu.matmul %11, %12, %cst_9 {dimension_numbers = #tpu.dot_dimension_numbers<[1], [0], [0], [1], [0, 0, 1, 1], [], []>} : vector<16x128xf32>, vector<128x128xf32>, vector<16x128xf32> -> vector<16x128xf32>
    %c0_10 = arith.constant 0 : index
    %c0_11 = arith.constant 0 : index
    %14 = vector.load %arg5[%c0_10, %c0_11] : memref<1x128xf32, #tpu.memory_space<vmem>>, vector<1x128xf32>
    %15 = vector.broadcast %14 : vector<1x128xf32> to vector<16x128xf32>
    %16 = arith.addf %13, %15 : vector<16x128xf32>
    %17 = arith.negf %16 : vector<16x128xf32>
    %18 = math.exp %17 : vector<16x128xf32>
    %cst_12 = arith.constant 1.000000e+00 : f32
    %19 = vector.broadcast %cst_12 : f32 to vector<16x128xf32>
    %20 = arith.addf %19, %18 : vector<16x128xf32>
    %21 = arith.divf %19, %20 : vector<16x128xf32>
    %22 = arith.mulf %16, %21 : vector<16x128xf32>
    %c0_13 = arith.constant 0 : index
    %c0_14 = arith.constant 0 : index
    %23 = vector.load %arg3[%c0_13, %c0_14] : memref<128x128xf32, #tpu.memory_space<vmem>>, vector<128x128xf32>
    %cst_15 = arith.constant dense<0.000000e+00> : vector<16x128xf32>
    %24 = tpu.matmul %22, %23, %cst_15 {dimension_numbers = #tpu.dot_dimension_numbers<[1], [0], [0], [1], [0, 0, 1, 1], [], []>} : vector<16x128xf32>, vector<128x128xf32>, vector<16x128xf32> -> vector<16x128xf32>
    %25 = arith.mulf %0, %24 : vector<16x128xf32>
    %c0_16 = arith.constant 0 : index
    %c0_17 = arith.constant 0 : index
    %26 = vector.load %arg7[%c0_16, %c0_17] : memref<16x128xf32, #tpu.memory_space<vmem>>, vector<16x128xf32>
    tpu.vector_store %arg7[%c0_16, %c0_17], %25 {strides = array<i32>} : memref<16x128xf32, #tpu.memory_space<vmem>>, vector<16x128xf32>,
    return
  }
  func.func @transform_0(%arg0: i32) -> (i32, i32) {
    %c0_i32 = arith.constant 0 : i32
    %c0_i32_0 = arith.constant 0 : i32
    return %arg0, %c0_i32 : i32, i32
  }
  func.func @transform_1(%arg0: i32) -> (i32, i32) {
    %c0_i32 = arith.constant 0 : i32
    %c0_i32_0 = arith.constant 0 : i32
    %c0_i32_1 = arith.constant 0 : i32
    return %c0_i32, %c0_i32_0 : i32, i32
  }
  func.func @transform_2(%arg0: i32) -> (i32, i32) {
    %c0_i32 = arith.constant 0 : i32
    %c0_i32_0 = arith.constant 0 : i32
    %c0_i32_1 = arith.constant 0 : i32
    return %c0_i32, %c0_i32_0 : i32, i32
  }
  func.func @transform_3(%arg0: i32) -> (i32, i32) {
    %c0_i32 = arith.constant 0 : i32
    %c0_i32_0 = arith.constant 0 : i32
    %c0_i32_1 = arith.constant 0 : i32
    return %c0_i32, %c0_i32_0 : i32, i32
  }
  func.func @transform_4(%arg0: i32) -> (i32, i32) {
    %c0_i32 = arith.constant 0 : i32
    %c0_i32_0 = arith.constant 0 : i32
    %c0_i32_1 = arith.constant 0 : i32
    return %c0_i32, %c0_i32_0 : i32, i32
  }
  func.func @transform_5(%arg0: i32) -> (i32, i32) {
    %c0_i32 = arith.constant 0 : i32
    %c0_i32_0 = arith.constant 0 : i32
    %c0_i32_1 = arith.constant 0 : i32
    return %c0_i32, %c0_i32_0 : i32, i32
  }
  func.func @transform_6(%arg0: i32) -> (i32, i32) {
    %c0_i32 = arith.constant 0 : i32
    %c0_i32_0 = arith.constant 0 : i32
    return %arg0, %c0_i32 : i32, i32
  }
}

</mosaic_0001>

<llo_original>
// kernel: tpu_custom_call.1
$region0: #{tpu_custom_call.1}
  #allocation0 [shape = 'u32[]', space=smem, size = 0x4, offset = 0x4, fixed_abs, tag = 'smem constant byte address 0x4 - core index']
  #allocation1 [shape = 'u32[144,128]{1,0:T(1,128)}', space=vmem, size = 0x12000, scoped, tag = 'internal scratch']
  %s0 = inlined_call_operand.hbm [shape: f32[20,128], index: 0, kind: input, shape index: {}]
  %s1 = inlined_call_operand.hbm [shape: f32[128,128], index: 1, kind: input, shape index: {}]
  %s2 = inlined_call_operand.hbm [shape: f32[128,128], index: 2, kind: input, shape index: {}]
  %s3 = inlined_call_operand.hbm [shape: f32[128,128], index: 3, kind: input, shape index: {}]
  %s4 = inlined_call_operand.vmem [shape: f32[1,128], index: 4, kind: input, shape index: {}]
  %s5 = inlined_call_operand.vmem [shape: f32[1,128], index: 5, kind: input, shape index: {}]
  %s6 = inlined_call_operand.hbm [shape: f32[20,128], index: 6, kind: output, shape index: {}]
  %s7 = sld [smem:[#allocation0]]
  $region73: #{tpu_custom_call.1} parent=0
    _
  %s9 = ssub.s32 1, %s7
  %s10 = scalar_select 0, %s9, %s7
  $region1: #{tpu_custom_call.1} parent=0
    #allocation2 [shape = 'u8[16384]{0}', space=vmem, size = 0x4000, scoped, tag = 'input window, operand 0']
    #allocation3 [shape = 's32[2]{0}', space=sflag, size = 0x8, scoped, tag = 'scoped memory for tpu_custom_call.1']
    #allocation4 [shape = 's32[2]{0}', space=sflag, size = 0x8, scoped, tag = 'scoped memory for tpu_custom_call.1']
    #allocation5 [shape = 'u8[65536]{0}', space=vmem, size = 0x10000, scoped, tag = 'input window, operand 1, single buffered']
    #allocation6 [shape = 's32[1]{0}', space=sflag, size = 0x4, scoped, tag = 'scoped memory for tpu_custom_call.1']
    #allocation7 [shape = 'u8[65536]{0}', space=vmem, size = 0x10000, scoped, tag = 'input window, operand 2, single buffered']
    #allocation8 [shape = 'u8[65536]{0}', space=vmem, size = 0x10000, scoped, tag = 'input window, operand 3, single buffered']
    #allocation9 [shape = 's32[1]{0}', space=sflag, size = 0x4, scoped, tag = 'scoped memory for tpu_custom_call.1']
    #allocation10 [shape = 'u8[16384]{0}', space=vmem, size = 0x4000, scoped, tag = 'output window, operand 0']
    %11 = vsyncpa [#allocation3], 0
    %s12 = scalar_lea.sflag [#allocation3], 1
    %13 = vsyncpa %s12, 0
    %14 = vsyncpa [#allocation6], 0
    %15 = vsyncpa [#allocation9], 0
    %16 = vsyncpa [#allocation4], 0
    %s17 = scalar_lea.sflag [#allocation4], 1
    %18 = vsyncpa %s17, 0
    loop: start=0, step=1, limit=4
    $region2: #{tpu_custom_call.1} parent=1 // loop_pre_header
      _
    $region3: #{tpu_custom_call.1} parent=1 // loop_header
      %s20 = sphi 0, %s24
      %p21 = scmp.ge.s32.totalorder %s20, 4
      %s30 = sphi 0, %s32
      %s33 = sphi 0, %s30
      %s34 = sphi 0, %s33
      %s50 = sphi 0, %s34
      %s54 = sphi 0, %s54
      %s56 = sphi 0, %s54
      %s57 = sphi 0, %s56
      %s71 = sphi 0, %s57
      %s75 = sphi 0, %s75
      %s77 = sphi 0, %s75
      %s78 = sphi 0, %s77
      %s92 = sphi 0, %s78
      %s96 = sphi 0, %s96
      %s98 = sphi 0, %s96
      %s99 = sphi 0, %s98
      %s113 = sphi 0, %s99
      %s117 = sphi 0, %s117
      %s119 = sphi 0, %s117
      %s120 = sphi 0, %s119
      %s134 = sphi 0, %s120
      %s138 = sphi 0, %s138
      %s140 = sphi 0, %s138
      %s141 = sphi 0, %s140
      %s155 = sphi 0, %s141
      %s161 = sphi 0, %s163
      %s164 = sphi 0, %s161
      %s165 = sphi 0, %s164
      %s181 = sphi 0, %s165
    $region4: #{tpu_custom_call.1} parent=1 // loop_header_branch
      %23 = sbr.rel (%p21) target = $region8
    $region5: #{tpu_custom_call.1} parent=1 // loop_body
      %s25 = ssub.s32 %s20, 1
      %s26 = ssub.s32 %s20, 2
      %s27 = sadd.s32 %s20, 1
      %s28 = ssub.s32 %s20, %s27
      %p29 = scmp.eq.s32.totalorder %s28, 0
      %s31 = sadd.s32 %s30, 1
      %s32 = scalar_select %p29, %s30, %s31
      %p35 = pneg %p29
      %p36 = scmp.eq.s32.totalorder %s20, 1
      %p37 = por %p35, %p36
      %p38 = scmp.ne.s32.totalorder %s30, %s33
      %p39 = scmp.eq.s32.totalorder %s20, 0
      %p40 = por %p38, %p39
      %p41 = scmp.ne.s32.totalorder %s30, %s33
      %p42 = scmp.eq.s32.totalorder %s25, 1
      %p43 = por %p41, %p42
      %p44 = scmp.ne.s32.totalorder %s33, %s34
      %p45 = scmp.eq.s32.totalorder %s25, 0
      %p46 = por %p44, %p45
      %p47 = scmp.ne.s32.totalorder %s33, %s34
      %p48 = scmp.eq.s32.totalorder %s26, 1
      %p49 = por %p47, %p48
      %p51 = scmp.ne.s32.totalorder %s34, %s50
      %p52 = scmp.eq.s32.totalorder %s26, 0
      %p53 = por %p51, %p52
      %s55 = sadd.s32 %s54, 1
      %p58 = scmp.eq.s32.totalorder %s20, 1
      %p59 = scmp.ne.s32.totalorder %s54, %s56
      %p60 = scmp.eq.s32.totalorder %s20, 0
      %p61 = por %p59, %p60
      %p62 = scmp.ne.s32.totalorder %s54, %s56
      %p63 = scmp.eq.s32.totalorder %s25, 1
      %p64 = por %p62, %p63
      %p65 = scmp.ne.s32.totalorder %s56, %s57
      %p66 = scmp.eq.s32.totalorder %s25, 0
      %p67 = por %p65, %p66
      %p68 = scmp.ne.s32.totalorder %s56, %s57
      %p69 = scmp.eq.s32.totalorder %s26, 1
      %p70 = por %p68, %p69
      %p72 = scmp.ne.s32.totalorder %s57, %s71
      %p73 = scmp.eq.s32.totalorder %s26, 0
      %p74 = por %p72, %p73
      %s76 = sadd.s32 %s75, 1
      %p79 = scmp.eq.s32.totalorder %s20, 1
      %p80 = scmp.ne.s32.totalorder %s75, %s77
      %p81 = scmp.eq.s32.totalorder %s20, 0
      %p82 = por %p80, %p81
      %p83 = scmp.ne.s32.totalorder %s75, %s77
      %p84 = scmp.eq.s32.totalorder %s25, 1
      %p85 = por %p83, %p84
      %p86 = scmp.ne.s32.totalorder %s77, %s78
      %p87 = scmp.eq.s32.totalorder %s25, 0
      %p88 = por %p86, %p87
      %p89 = scmp.ne.s32.totalorder %s77, %s78
      %p90 = scmp.eq.s32.totalorder %s26, 1
      %p91 = por %p89, %p90
      %p93 = scmp.ne.s32.totalorder %s78, %s92
      %p94 = scmp.eq.s32.totalorder %s26, 0
      %p95 = por %p93, %p94
      %s97 = sadd.s32 %s96, 1
      %p100 = scmp.eq.s32.totalorder %s20, 1
      %p101 = scmp.ne.s32.totalorder %s96, %s98
      %p102 = scmp.eq.s32.totalorder %s20, 0
      %p103 = por %p101, %p102
      %p104 = scmp.ne.s32.totalorder %s96, %s98
      %p105 = scmp.eq.s32.totalorder %s25, 1
      %p106 = por %p104, %p105
      %p107 = scmp.ne.s32.totalorder %s98, %s99
      %p108 = scmp.eq.s32.totalorder %s25, 0
      %p109 = por %p107, %p108
      %p110 = scmp.ne.s32.totalorder %s98, %s99
      %p111 = scmp.eq.s32.totalorder %s26, 1
      %p112 = por %p110, %p111
      %p114 = scmp.ne.s32.totalorder %s99, %s113
      %p115 = scmp.eq.s32.totalorder %s26, 0
      %p116 = por %p114, %p115
      %s118 = sadd.s32 %s117, 1
      %p121 = scmp.eq.s32.totalorder %s20, 1
      %p122 = scmp.ne.s32.totalorder %s117, %s119
      %p123 = scmp.eq.s32.totalorder %s20, 0
      %p124 = por %p122, %p123
      %p125 = scmp.ne.s32.totalorder %s117, %s119
      %p126 = scmp.eq.s32.totalorder %s25, 1
      %p127 = por %p125, %p126
      %p128 = scmp.ne.s32.totalorder %s119, %s120
      %p129 = scmp.eq.s32.totalorder %s25, 0
      %p130 = por %p128, %p129
      %p131 = scmp.ne.s32.totalorder %s119, %s120
      %p132 = scmp.eq.s32.totalorder %s26, 1
      %p133 = por %p131, %p132
      %p135 = scmp.ne.s32.totalorder %s120, %s134
      %p136 = scmp.eq.s32.totalorder %s26, 0
      %p137 = por %p135, %p136
      %s139 = sadd.s32 %s138, 1
      %p142 = scmp.eq.s32.totalorder %s20, 1
      %p143 = scmp.ne.s32.totalorder %s138, %s140
      %p144 = scmp.eq.s32.totalorder %s20, 0
      %p145 = por %p143, %p144
      %p146 = scmp.ne.s32.totalorder %s138, %s140
      %p147 = scmp.eq.s32.totalorder %s25, 1
      %p148 = por %p146, %p147
      %p149 = scmp.ne.s32.totalorder %s140, %s141
      %p150 = scmp.eq.s32.totalorder %s25, 0
      %p151 = por %p149, %p150
      %p152 = scmp.ne.s32.totalorder %s140, %s141
      %p153 = scmp.eq.s32.totalorder %s26, 1
      %p154 = por %p152, %p153
      %p156 = scmp.ne.s32.totalorder %s141, %s155
      %p157 = scmp.eq.s32.totalorder %s26, 0
      %p158 = por %p156, %p157
      %s159 = ssub.s32 %s20, %s27
      %p160 = scmp.eq.s32.totalorder %s159, 0
      %s162 = sadd.s32 %s161, 1
      %s163 = scalar_select %p160, %s161, %s162
      %p166 = pneg %p160
      %p167 = scmp.eq.s32.totalorder %s20, 1
      %p168 = por %p166, %p167
      %p169 = scmp.ne.s32.totalorder %s161, %s164
      %p170 = scmp.eq.s32.totalorder %s20, 0
      %p171 = por %p169, %p170
      %p172 = scmp.ne.s32.totalorder %s161, %s164
      %p173 = scmp.eq.s32.totalorder %s25, 1
      %p174 = por %p172, %p173
      %p175 = scmp.ne.s32.totalorder %s164, %s165
      %p176 = scmp.eq.s32.totalorder %s25, 0
      %p177 = por %p175, %p176
      %p178 = scmp.ne.s32.totalorder %s164, %s165
      %p179 = scmp.eq.s32.totalorder %s26, 1
      %p180 = por %p178, %p179
      %p182 = scmp.ne.s32.totalorder %s165, %s181
      %p183 = scmp.eq.s32.totalorder %s26, 0
      %p184 = por %p182, %p183
      %p185 = scmp.le.s32.totalorder 1, %s20
      %p186 = scmp.lt.s32.totalorder %s20, 3
      %p187 = pnand %p185, %p186
      %p188 = pneg %p187
      // Predicated region
      $region9: #{tpu_custom_call.1} parent=5 // pred_check
        _
      $region10: #{tpu_custom_call.1} parent=5 // pred_check_branch
        %190 = sbr.rel (%p187) target = $region12
      $region11: #{tpu_custom_call.1} parent=5 // pred_region
        %s191 = ssub.s32 %s20, 1
        // Predicated region
        $region13: #{tpu_custom_call.1} parent=11 // pred_check
          %p192 = pneg %p67
        $region14: #{tpu_custom_call.1} parent=11 // pred_check_branch
          %194 = sbr.rel (%p192) target = $region16
        $region15: #{tpu_custom_call.1} parent=11 // pred_region
          %s196 = ssub.s32 2048, 2048
          %197 = vsyncadd [#allocation6], %s196
          %s198 = sshll.u32 [#allocation5], 4
          %s199 = int_to_ptr.vmem [resolvable:$true] %s198
          %204 = dma.hbm_to_vmem [thread:$0]  %s1, 2048, %s199, [#allocation6], 128, 128, 8
        $region16: #{tpu_custom_call.1} parent=11 // pred_fallthru
          _
        // Predicated region
        $region17: #{tpu_custom_call.1} parent=11 // pred_check
          %p205 = pneg %p88
        $region18: #{tpu_custom_call.1} parent=11 // pred_check_branch
          %207 = sbr.rel (%p205) target = $region20
        $region19: #{tpu_custom_call.1} parent=11 // pred_region
          %s209 = ssub.s32 2048, 2048
          %210 = vsyncadd [#allocation6], %s209
          %s211 = sshll.u32 [#allocation7], 4
          %s212 = int_to_ptr.vmem [resolvable:$true] %s211
          %217 = dma.hbm_to_vmem [thread:$0]  %s2, 2048, %s212, [#allocation6], 128, 128, 8
        $region20: #{tpu_custom_call.1} parent=11 // pred_fallthru
          _
        // Predicated region
        $region21: #{tpu_custom_call.1} parent=11 // pred_check
          %p218 = pneg %p109
        $region22: #{tpu_custom_call.1} parent=11 // pred_check_branch
          %220 = sbr.rel (%p218) target = $region24
        $region23: #{tpu_custom_call.1} parent=11 // pred_region
          %s222 = ssub.s32 2048, 2048
          %223 = vsyncadd [#allocation9], %s222
          %s224 = sshll.u32 [#allocation8], 4
          %s225 = int_to_ptr.vmem [resolvable:$true] %s224
          %230 = dma.hbm_to_vmem [thread:$0]  %s3, 2048, %s225, [#allocation9], 128, 128, 8
        $region24: #{tpu_custom_call.1} parent=11 // pred_fallthru
          _
        // Predicated region
        $region25: #{tpu_custom_call.1} parent=11 // pred_check
          %p231 = pneg %p130
        $region26: #{tpu_custom_call.1} parent=11 // pred_check_branch
          %233 = sbr.rel (%p231) target = $region28
        $region27: #{tpu_custom_call.1} parent=11 // pred_region
          _
        $region28: #{tpu_custom_call.1} parent=11 // pred_fallthru
          _
        // Predicated region
        $region29: #{tpu_custom_call.1} parent=11 // pred_check
          %p234 = pneg %p151
        $region30: #{tpu_custom_call.1} parent=11 // pred_check_branch
          %236 = sbr.rel (%p234) target = $region32
        $region31: #{tpu_custom_call.1} parent=11 // pred_region
          _
        $region32: #{tpu_custom_call.1} parent=11 // pred_fallthru
          _
      $region12: #{tpu_custom_call.1} parent=5 // pred_fallthru
        _
      %p237 = scmp.lt.s32.totalorder %s20, 2
      // Predicated region
      $region33: #{tpu_custom_call.1} parent=5 // pred_check
        %p238 = pneg %p237
      $region34: #{tpu_custom_call.1} parent=5 // pred_check_branch
        %240 = sbr.rel (%p238) target = $region36
      $region35: #{tpu_custom_call.1} parent=5 // pred_region
        // Predicated region
        $region37: #{tpu_custom_call.1} parent=35 // pred_check
          %p241 = pneg %p40
        $region38: #{tpu_custom_call.1} parent=35 // pred_check_branch
          %243 = sbr.rel (%p241) target = $region40
        $region39: #{tpu_custom_call.1} parent=35 // pred_region
          %s244 = sand.u32 %s30, 1
          %s245 = scalar_lea.sflag [#allocation3], %s244
          %s246 = sand.u32 %s30, 1
          %s247 = smul.addr %s246, 16
          %s248 = scalar_lea.vmem [#allocation2], %s247
          %s249 = smul.u32 2, %s20
          %s250 = ssub.s32 3, %s249
          %p251 = scmp.lt.s32.totalorder %s250, 2
          %s252 = scalar_select %p251, %s250, 2
          %s253 = smul.u32 128, %s252
          %s255 = ssub.s32 256, %s253
          %256 = vsyncadd %s245, %s255
          %p257 = scmp.ne.s32.totalorder 0, %s253
          %s258 = smul.addr %s249, 128
          %s259 = scalar_lea.hbm %s0, %s258
          %s260 = smul.u32 8, %s252
          %s261 = sshll.u32 %s248, 4
          %s262 = int_to_ptr.vmem [resolvable:$true] %s261
          %s263 = sshll.u32 %s260, 4
          %267 = dma.hbm_to_vmem [thread:$0]  (%p257), %s259, %s263, %s262, %s245, 128, 128, 8
        $region40: #{tpu_custom_call.1} parent=35 // pred_fallthru
          _
      $region36: #{tpu_custom_call.1} parent=5 // pred_fallthru
        _
      %p268 = scmp.le.s32.totalorder 1, %s20
      %p269 = scmp.lt.s32.totalorder %s20, 3
      %p270 = pnand %p268, %p269
      %p271 = pneg %p270
      // Predicated region
      $region41: #{tpu_custom_call.1} parent=5 // pred_check
        _
      $region42: #{tpu_custom_call.1} parent=5 // pred_check_branch
        %273 = sbr.rel (%p270) target = $region44
      $region43: #{tpu_custom_call.1} parent=5 // pred_region
        %s274 = ssub.s32 %s20, 1
        %s275 = sand.u32 %s33, 1
        %s276 = scalar_lea.sflag [#allocation3], %s275
        %s277 = sand.u32 %s33, 1
        %s278 = smul.addr %s277, 16
        %s279 = scalar_lea.vmem [#allocation2], %s278
        // Predicated region
        $region45: #{tpu_custom_call.1} parent=43 // pred_check
          %p280 = pneg %p46
        $region46: #{tpu_custom_call.1} parent=43 // pred_check_branch
          %282 = sbr.rel (%p280) target = $region48
        $region47: #{tpu_custom_call.1} parent=43 // pred_region
          %283 = dma.done %s276, 256
        $region48: #{tpu_custom_call.1} parent=43 // pred_fallthru
          _
        // Predicated region
        $region49: #{tpu_custom_call.1} parent=43 // pred_check
          %p284 = pneg %p67
        $region50: #{tpu_custom_call.1} parent=43 // pred_check_branch
          %286 = sbr.rel (%p284) target = $region52
        $region51: #{tpu_custom_call.1} parent=43 // pred_region
          %287 = dma.done [#allocation6], 2048
        $region52: #{tpu_custom_call.1} parent=43 // pred_fallthru
          _
        // Predicated region
        $region53: #{tpu_custom_call.1} parent=43 // pred_check
          %p288 = pneg %p88
        $region54: #{tpu_custom_call.1} parent=43 // pred_check_branch
          %290 = sbr.rel (%p288) target = $region56
        $region55: #{tpu_custom_call.1} parent=43 // pred_region
          %291 = dma.done [#allocation6], 2048
        $region56: #{tpu_custom_call.1} parent=43 // pred_fallthru
          _
        // Predicated region
        $region57: #{tpu_custom_call.1} parent=43 // pred_check
          %p292 = pneg %p109
        $region58: #{tpu_custom_call.1} parent=43 // pred_check_branch
          %294 = sbr.rel (%p292) target = $region60
        $region59: #{tpu_custom_call.1} parent=43 // pred_region
          %295 = dma.done [#allocation9], 2048
        $region60: #{tpu_custom_call.1} parent=43 // pred_fallthru
          _
        %s296 = sand.u32 %s33, 1
        %s297 = scalar_lea.sflag [#allocation3], %s296
        %s298 = sand.u32 %s33, 1
        %s299 = smul.addr %s298, 16
        %s300 = scalar_lea.vmem [#allocation2], %s299
        %p301 = pneg %p46
        %p302 = pneg %p43
        %p303 = pneg %p67
        %p304 = pneg %p64
        %p305 = pneg %p88
        %p306 = pneg %p85
        %p307 = pneg %p109
        %p308 = pneg %p106
        %p309 = pneg %p130
        %p310 = pneg %p127
        %p311 = pneg %p151
        %p312 = pneg %p148
        %p313 = pneg %p177
        %p314 = pneg %p174
        %s315 = sand.u32 %s164, 1
        %s316 = scalar_lea.sflag [#allocation4], %s315
        %s317 = sand.u32 %s164, 1
        %s318 = smul.addr %s317, 16
        %s319 = scalar_lea.vmem [#allocation10], %s318
        %s320 = smul.u32 2, %s25
        %s321 = ssub.s32 3, %s320
        %p322 = scmp.lt.s32.totalorder %s321, 2
        %s323 = scalar_select %p322, %s321, 2
        %s324 = smul.u32 128, %s323
        %s325 = smul.u32 2, %s25
        %s326 = ssub.s32 3, %s325
        %p327 = scmp.lt.s32.totalorder %s326, 2
        %s328 = scalar_select %p327, %s326, 2
        %s329 = smul.u32 128, %s328
        %v330 = vld [vmem:[%s279] sm:$0xff]
        %v331 = vld [vmem:[%s279 + $0x8] sm:$0xff]
        %v332 = vld [vmem:[#allocation5] sm:$0xff]
        %v333 = vld [vmem:[#allocation5 + $0x8] sm:$0xff]
        %v334 = vld [vmem:[#allocation5 + $0x10] sm:$0xff]
        %v335 = vld [vmem:[#allocation5 + $0x18] sm:$0xff]
        %v336 = vld [vmem:[#allocation5 + $0x20] sm:$0xff]
        %v337 = vld [vmem:[#allocation5 + $0x28] sm:$0xff]
        %v338 = vld [vmem:[#allocation5 + $0x30] sm:$0xff]
        %v339 = vld [vmem:[#allocation5 + $0x38] sm:$0xff]
        %v340 = vld [vmem:[#allocation5 + $0x40] sm:$0xff]
        %v341 = vld [vmem:[#allocation5 + $0x48] sm:$0xff]
        %v342 = vld [vmem:[#allocation5 + $0x50] sm:$0xff]
        %v343 = vld [vmem:[#allocation5 + $0x58] sm:$0xff]
        %v344 = vld [vmem:[#allocation5 + $0x60] sm:$0xff]
        %v345 = vld [vmem:[#allocation5 + $0x68] sm:$0xff]
        %v346 = vld [vmem:[#allocation5 + $0x70] sm:$0xff]
        %v347 = vld [vmem:[#allocation5 + $0x78] sm:$0xff]
        %348 = vmatprep.subr.mxu0 0.0
        %349 = vmatpush1.msra.mxu0 %v332
        %350 = vmatprep.subr.mxu0 0.0
        %351 = vmatpush1.msra.mxu0 %v333
        %352 = vmatprep.subr.mxu0 0.0
        %353 = vmatpush1.msra.mxu0 %v334
        %354 = vmatprep.subr.mxu0 0.0
        %355 = vmatpush1.msra.mxu0 %v335
        %356 = vmatprep.subr.mxu0 0.0
        %357 = vmatpush1.msra.mxu0 %v336
        %358 = vmatprep.subr.mxu0 0.0
        %359 = vmatpush1.msra.mxu0 %v337
        %360 = vmatprep.subr.mxu0 0.0
        %361 = vmatpush1.msra.mxu0 %v338
        %362 = vmatprep.subr.mxu0 0.0
        %363 = vmatpush1.msra.mxu0 %v339
        %364 = vmatprep.subr.mxu0 0.0
        %365 = vmatpush1.msra.mxu0 %v340
        %366 = vmatprep.subr.mxu0 0.0
        %367 = vmatpush1.msra.mxu0 %v341
        %368 = vmatprep.subr.mxu0 0.0
        %369 = vmatpush1.msra.mxu0 %v342
        %370 = vmatprep.subr.mxu0 0.0
        %371 = vmatpush1.msra.mxu0 %v343
        %372 = vmatprep.subr.mxu0 0.0
        %373 = vmatpush1.msra.mxu0 %v344
        %374 = vmatprep.subr.mxu0 0.0
        %375 = vmatpush1.msra.mxu0 %v345
        %376 = vmatprep.subr.mxu0 0.0
        %377 = vmatpush1.msra.mxu0 %v346
        %378 = vmatprep.subr.mxu0 0.0
        %379 = vmatpush1.msra.mxu0 %v347
        %380 = vmatprep.subr.mxu0 0.0
        %381 = vmatpush1.msra.mxu0 0.0
        %382 = vmatprep.subr.mxu0 0.0
        %383 = vmatpush1.msra.mxu0 0.0
        %384 = vmatprep.subr.mxu0 0.0
        %385 = vmatpush1.msra.mxu0 0.0
        %386 = vmatprep.subr.mxu0 0.0
        %387 = vmatpush1.msra.mxu0 0.0
        %388 = vmatprep.subr.mxu0 0.0
        %389 = vmatpush1.msra.mxu0 0.0
        %390 = vmatprep.subr.mxu0 0.0
        %391 = vmatpush1.msra.mxu0 0.0
        %392 = vmatprep.subr.mxu0 0.0
        %393 = vmatpush1.msra.mxu0 0.0
        %394 = vmatprep.subr.mxu0 0.0
        %395 = vmatpush1.msra.mxu0 0.0
        %396 = vmatprep.subr.mxu0 0.0
        %397 = vmatpush1.msra.mxu0 0.0
        %398 = vmatprep.subr.mxu0 0.0
        %399 = vmatpush1.msra.mxu0 0.0
        %400 = vmatprep.subr.mxu0 0.0
        %401 = vmatpush1.msra.mxu0 0.0
        %402 = vmatprep.subr.mxu0 0.0
        %403 = vmatpush1.msra.mxu0 0.0
        %404 = vmatprep.subr.mxu0 0.0
        %405 = vmatpush1.msra.mxu0 0.0
        %406 = vmatprep.subr.mxu0 0.0
        %407 = vmatpush1.msra.mxu0 0.0
        %408 = vmatprep.subr.mxu0 0.0
        %409 = vmatpush1.msra.mxu0 0.0
        %410 = vmatprep.subr.mxu0 0.0
        %411 = vmatpush1.msra.mxu0 0.0
        %412 = vmatprep.mubr.f32.mxu0 0.0
        %413 = vmatmul.mubr.f32.gmra.mrb[0].mxu0 %v330
        %v414 = vpop.f32.mrb[0].mxu0
        %v415 = vadd.f32 0.0, %v414
        %v416 = vpop.f32.mrb[0].mxu0
        %417 = vmatprep.mubr.f32.mxu0 0.0
        %418 = vmatmul.mubr.f32.gmra.mrb[0].mxu0 %v331
        %v419 = vpop.f32.mrb[0].mxu0
        %v420 = vadd.f32 0.0, %v419
        %v421 = vpop.f32.mrb[0].mxu0
        %422 = vdwg.mxu0
        %v423 = vmul.f32 %v330, %v330
        %v424 = vmul.f32 %v331, %v331
        %425 = vmatprep.subr.mxu0 0.0
        %426 = vmatpush1.msra.mxu0 %v332
        %427 = vmatprep.subr.mxu0 0.0
        %428 = vmatpush1.msra.mxu0 %v333
        %429 = vmatprep.subr.mxu0 0.0
        %430 = vmatpush1.msra.mxu0 %v334
        %431 = vmatprep.subr.mxu0 0.0
        %432 = vmatpush1.msra.mxu0 %v335
        %433 = vmatprep.subr.mxu0 0.0
        %434 = vmatpush1.msra.mxu0 %v336
        %435 = vmatprep.subr.mxu0 0.0
        %436 = vmatpush1.msra.mxu0 %v337
        %437 = vmatprep.subr.mxu0 0.0
        %438 = vmatpush1.msra.mxu0 %v338
        %439 = vmatprep.subr.mxu0 0.0
        %440 = vmatpush1.msra.mxu0 %v339
        %441 = vmatprep.subr.mxu0 0.0
        %442 = vmatpush1.msra.mxu0 %v340
        %443 = vmatprep.subr.mxu0 0.0
        %444 = vmatpush1.msra.mxu0 %v341
        %445 = vmatprep.subr.mxu0 0.0
        %446 = vmatpush1.msra.mxu0 %v342
        %447 = vmatprep.subr.mxu0 0.0
        %448 = vmatpush1.msra.mxu0 %v343
        %449 = vmatprep.subr.mxu0 0.0
        %450 = vmatpush1.msra.mxu0 %v344
        %451 = vmatprep.subr.mxu0 0.0
        %452 = vmatpush1.msra.mxu0 %v345
        %453 = vmatprep.subr.mxu0 0.0
        %454 = vmatpush1.msra.mxu0 %v346
        %455 = vmatprep.subr.mxu0 0.0
        %456 = vmatpush1.msra.mxu0 %v347
        %457 = vmatprep.subr.mxu0 0.0
        %458 = vmatpush1.msra.mxu0 0.0
        %459 = vmatprep.subr.mxu0 0.0
        %460 = vmatpush1.msra.mxu0 0.0
        %461 = vmatprep.subr.mxu0 0.0
        %462 = vmatpush1.msra.mxu0 0.0
        %463 = vmatprep.subr.mxu0 0.0
        %464 = vmatpush1.msra.mxu0 0.0
        %465 = vmatprep.subr.mxu0 0.0
        %466 = vmatpush1.msra.mxu0 0.0
        %467 = vmatprep.subr.mxu0 0.0
        %468 = vmatpush1.msra.mxu0 0.0
        %469 = vmatprep.subr.mxu0 0.0
        %470 = vmatpush1.msra.mxu0 0.0
        %471 = vmatprep.subr.mxu0 0.0
        %472 = vmatpush1.msra.mxu0 0.0
        %473 = vmatprep.subr.mxu0 0.0
        %474 = vmatpush1.msra.mxu0 0.0
        %475 = vmatprep.subr.mxu0 0.0
        %476 = vmatpush1.msra.mxu0 0.0
        %477 = vmatprep.subr.mxu0 0.0
        %478 = vmatpush1.msra.mxu0 0.0
        %479 = vmatprep.subr.mxu0 0.0
        %480 = vmatpush1.msra.mxu0 0.0
        %481 = vmatprep.subr.mxu0 0.0
        %482 = vmatpush1.msra.mxu0 0.0
        %483 = vmatprep.subr.mxu0 0.0
        %484 = vmatpush1.msra.mxu0 0.0
        %485 = vmatprep.subr.mxu0 0.0
        %486 = vmatpush1.msra.mxu0 0.0
        %487 = vmatprep.subr.mxu0 0.0
        %488 = vmatpush1.msra.mxu0 0.0
        %489 = vmatprep.mubr.f32.mxu0 0.0
        %490 = vmatmul.mubr.f32.gmra.mrb[0].mxu0 %v423
        %v491 = vpop.f32.mrb[0].mxu0
        %v492 = vadd.f32 0.0, %v491
        %v493 = vpop.f32.mrb[0].mxu0
        %494 = vmatprep.mubr.f32.mxu0 0.0
        %495 = vmatmul.mubr.f32.gmra.mrb[0].mxu0 %v424
        %v496 = vpop.f32.mrb[0].mxu0
        %v497 = vadd.f32 0.0, %v496
        %v498 = vpop.f32.mrb[0].mxu0
        %499 = vdwg.mxu0
        %v500 = vld [vmem:[%s5] sm:$0x1]
        %vm501 = vcmp.ne.f32.partialorder %v500, 0.0
        %v502 = vrsqrt.pop %v492
        %v503 = vmul.f32 %v492, %v502
        %vm504 = vcmp.eq.f32.partialorder %v492, inf
        %v505 = vsel %vm504, %v492, %v503
        %vm506 = vcmp.eq.f32.partialorder %v492, 0.0
        %v507 = vand.u32 %v492, 2147483648
        %v508 = vsel %vm506, %v507, %v505
        %v509 = vrsqrt.pop %v497
        %v510 = vmul.f32 %v497, %v509
        %vm511 = vcmp.eq.f32.partialorder %v497, inf
        %v512 = vsel %vm511, %v497, %v510
        %vm513 = vcmp.eq.f32.partialorder %v497, 0.0
        %v514 = vand.u32 %v497, 2147483648
        %v515 = vsel %vm513, %v514, %v512
        %v516 = vsel %vm501, 1, 0
        %v517 = vlaneseq
        %v518 = vshrl.u32 %v517, 7
        %v519 = vsub.s32 0, %v518
        %v520 = vrot.slane %v516, %v519
        %vm521 = vcmp.eq.s32.totalorder %v520, 1
        %v522 = vsel %vm521, %v415, %v508
        %v523 = vsel %vm521, %v420, %v515
        %v524 = vld [vmem:[#allocation8] sm:$0xff]
        %v525 = vld [vmem:[#allocation8 + $0x8] sm:$0xff]
        %v526 = vld [vmem:[#allocation8 + $0x10] sm:$0xff]
        %v527 = vld [vmem:[#allocation8 + $0x18] sm:$0xff]
        %v528 = vld [vmem:[#allocation8 + $0x20] sm:$0xff]
        %v529 = vld [vmem:[#allocation8 + $0x28] sm:$0xff]
        %v530 = vld [vmem:[#allocation8 + $0x30] sm:$0xff]
        %v531 = vld [vmem:[#allocation8 + $0x38] sm:$0xff]
        %v532 = vld [vmem:[#allocation8 + $0x40] sm:$0xff]
        %v533 = vld [vmem:[#allocation8 + $0x48] sm:$0xff]
        %v534 = vld [vmem:[#allocation8 + $0x50] sm:$0xff]
        %v535 = vld [vmem:[#allocation8 + $0x58] sm:$0xff]
        %v536 = vld [vmem:[#allocation8 + $0x60] sm:$0xff]
        %v537 = vld [vmem:[#allocation8 + $0x68] sm:$0xff]
        %v538 = vld [vmem:[#allocation8 + $0x70] sm:$0xff]
        %v539 = vld [vmem:[#allocation8 + $0x78] sm:$0xff]
        %v540 = vld [vmem:[%s4] sm:$0x1]
        %v542 = vlaneseq
        %v543 = vshrl.u32 %v542, 7
        %v544 = vsub.s32 0, %v543
        %v545 = vrot.slane %v540, %v544
        %547 = vmatprep.subr.mxu0 0.0
        %548 = vmatpush1.msra.mxu0 %v524
        %549 = vmatprep.subr.mxu0 0.0
        %550 = vmatpush1.msra.mxu0 %v525
        %551 = vmatprep.subr.mxu0 0.0
        %552 = vmatpush1.msra.mxu0 %v526
        %553 = vmatprep.subr.mxu0 0.0
        %554 = vmatpush1.msra.mxu0 %v527
        %555 = vmatprep.subr.mxu0 0.0
        %556 = vmatpush1.msra.mxu0 %v528
        %557 = vmatprep.subr.mxu0 0.0
        %558 = vmatpush1.msra.mxu0 %v529
        %559 = vmatprep.subr.mxu0 0.0
        %560 = vmatpush1.msra.mxu0 %v530
        %561 = vmatprep.subr.mxu0 0.0
        %562 = vmatpush1.msra.mxu0 %v531
        %563 = vmatprep.subr.mxu0 0.0
        %564 = vmatpush1.msra.mxu0 %v532
        %565 = vmatprep.subr.mxu0 0.0
        %566 = vmatpush1.msra.mxu0 %v533
        %567 = vmatprep.subr.mxu0 0.0
        %568 = vmatpush1.msra.mxu0 %v534
        %569 = vmatprep.subr.mxu0 0.0
        %570 = vmatpush1.msra.mxu0 %v535
        %571 = vmatprep.subr.mxu0 0.0
        %572 = vmatpush1.msra.mxu0 %v536
        %573 = vmatprep.subr.mxu0 0.0
        %574 = vmatpush1.msra.mxu0 %v537
        %575 = vmatprep.subr.mxu0 0.0
        %576 = vmatpush1.msra.mxu0 %v538
        %577 = vmatprep.subr.mxu0 0.0
        %578 = vmatpush1.msra.mxu0 %v539
        %579 = vmatprep.subr.mxu0 0.0
        %580 = vmatpush1.msra.mxu0 0.0
        %581 = vmatprep.subr.mxu0 0.0
        %582 = vmatpush1.msra.mxu0 0.0
        %583 = vmatprep.subr.mxu0 0.0
        %584 = vmatpush1.msra.mxu0 0.0
        %585 = vmatprep.subr.mxu0 0.0
        %586 = vmatpush1.msra.mxu0 0.0
        %587 = vmatprep.subr.mxu0 0.0
        %588 = vmatpush1.msra.mxu0 0.0
        %589 = vmatprep.subr.mxu0 0.0
        %590 = vmatpush1.msra.mxu0 0.0
        %591 = vmatprep.subr.mxu0 0.0
        %592 = vmatpush1.msra.mxu0 0.0
        %593 = vmatprep.subr.mxu0 0.0
        %594 = vmatpush1.msra.mxu0 0.0
        %595 = vmatprep.subr.mxu0 0.0
        %596 = vmatpush1.msra.mxu0 0.0
        %597 = vmatprep.subr.mxu0 0.0
        %598 = vmatpush1.msra.mxu0 0.0
        %599 = vmatprep.subr.mxu0 0.0
        %600 = vmatpush1.msra.mxu0 0.0
        %601 = vmatprep.subr.mxu0 0.0
        %602 = vmatpush1.msra.mxu0 0.0
        %603 = vmatprep.subr.mxu0 0.0
        %604 = vmatpush1.msra.mxu0 0.0
        %605 = vmatprep.subr.mxu0 0.0
        %606 = vmatpush1.msra.mxu0 0.0
        %607 = vmatprep.subr.mxu0 0.0
        %608 = vmatpush1.msra.mxu0 0.0
        %609 = vmatprep.subr.mxu0 0.0
        %610 = vmatpush1.msra.mxu0 0.0
        %611 = vmatprep.mubr.f32.mxu0 0.0
        %612 = vmatmul.mubr.f32.gmra.mrb[0].mxu0 %v522
        %v613 = vpop.f32.mrb[0].mxu0
        %v614 = vadd.f32 %v545, %v613
        %v615 = vpop.f32.mrb[0].mxu0
        %616 = vmatprep.mubr.f32.mxu0 0.0
        %617 = vmatmul.mubr.f32.gmra.mrb[0].mxu0 %v523
        %v618 = vpop.f32.mrb[0].mxu0
        %v619 = vadd.f32 %v545, %v618
        %v620 = vpop.f32.mrb[0].mxu0
        %621 = vdwg.mxu0
        %v622 = vxor.u32 %v614, 2147483648
        %v623 = vxor.u32 %v619, 2147483648
        %v624 = vmul.f32 %v622, 1.442695
        %v625 = vpow.pop %v624
        %v626 = vmul.f32 %v623, 1.442695
        %v627 = vpow.pop %v626
        %v628 = vadd.f32 %v625, 1.0
        %v629 = vadd.f32 %v627, 1.0
        %v630 = vrcp.pop %v628
        %v631 = vmul.f32 1.0, %v630
        %v632 = vrcp.pop %v629
        %v633 = vmul.f32 1.0, %v632
        %v634 = vmul.f32 %v614, %v631
        %v635 = vmul.f32 %v619, %v633
        %v636 = vld [vmem:[#allocation7] sm:$0xff]
        %v637 = vld [vmem:[#allocation7 + $0x8] sm:$0xff]
        %v638 = vld [vmem:[#allocation7 + $0x10] sm:$0xff]
        %v639 = vld [vmem:[#allocation7 + $0x18] sm:$0xff]
        %v640 = vld [vmem:[#allocation7 + $0x20] sm:$0xff]
        %v641 = vld [vmem:[#allocation7 + $0x28] sm:$0xff]
        %v642 = vld [vmem:[#allocation7 + $0x30] sm:$0xff]
        %v643 = vld [vmem:[#allocation7 + $0x38] sm:$0xff]
        %v644 = vld [vmem:[#allocation7 + $0x40] sm:$0xff]
        %v645 = vld [vmem:[#allocation7 + $0x48] sm:$0xff]
        %v646 = vld [vmem:[#allocation7 + $0x50] sm:$0xff]
        %v647 = vld [vmem:[#allocation7 + $0x58] sm:$0xff]
        %v648 = vld [vmem:[#allocation7 + $0x60] sm:$0xff]
        %v649 = vld [vmem:[#allocation7 + $0x68] sm:$0xff]
        %v650 = vld [vmem:[#allocation7 + $0x70] sm:$0xff]
        %v651 = vld [vmem:[#allocation7 + $0x78] sm:$0xff]
        %652 = vmatprep.subr.mxu0 0.0
        %653 = vmatpush1.msra.mxu0 %v636
        %654 = vmatprep.subr.mxu0 0.0
        %655 = vmatpush1.msra.mxu0 %v637
        %656 = vmatprep.subr.mxu0 0.0
        %657 = vmatpush1.msra.mxu0 %v638
        %658 = vmatprep.subr.mxu0 0.0
        %659 = vmatpush1.msra.mxu0 %v639
        %660 = vmatprep.subr.mxu0 0.0
        %661 = vmatpush1.msra.mxu0 %v640
        %662 = vmatprep.subr.mxu0 0.0
        %663 = vmatpush1.msra.mxu0 %v641
        %664 = vmatprep.subr.mxu0 0.0
        %665 = vmatpush1.msra.mxu0 %v642
        %666 = vmatprep.subr.mxu0 0.0
        %667 = vmatpush1.msra.mxu0 %v643
        %668 = vmatprep.subr.mxu0 0.0
        %669 = vmatpush1.msra.mxu0 %v644
        %670 = vmatprep.subr.mxu0 0.0
        %671 = vmatpush1.msra.mxu0 %v645
        %672 = vmatprep.subr.mxu0 0.0
        %673 = vmatpush1.msra.mxu0 %v646
        %674 = vmatprep.subr.mxu0 0.0
        %675 = vmatpush1.msra.mxu0 %v647
        %676 = vmatprep.subr.mxu0 0.0
        %677 = vmatpush1.msra.mxu0 %v648
        %678 = vmatprep.subr.mxu0 0.0
        %679 = vmatpush1.msra.mxu0 %v649
        %680 = vmatprep.subr.mxu0 0.0
        %681 = vmatpush1.msra.mxu0 %v650
        %682 = vmatprep.subr.mxu0 0.0
        %683 = vmatpush1.msra.mxu0 %v651
        %684 = vmatprep.subr.mxu0 0.0
        %685 = vmatpush1.msra.mxu0 0.0
        %686 = vmatprep.subr.mxu0 0.0
        %687 = vmatpush1.msra.mxu0 0.0
        %688 = vmatprep.subr.mxu0 0.0
        %689 = vmatpush1.msra.mxu0 0.0
        %690 = vmatprep.subr.mxu0 0.0
        %691 = vmatpush1.msra.mxu0 0.0
        %692 = vmatprep.subr.mxu0 0.0
        %693 = vmatpush1.msra.mxu0 0.0
        %694 = vmatprep.subr.mxu0 0.0
        %695 = vmatpush1.msra.mxu0 0.0
        %696 = vmatprep.subr.mxu0 0.0
        %697 = vmatpush1.msra.mxu0 0.0
        %698 = vmatprep.subr.mxu0 0.0
        %699 = vmatpush1.msra.mxu0 0.0
        %700 = vmatprep.subr.mxu0 0.0
        %701 = vmatpush1.msra.mxu0 0.0
        %702 = vmatprep.subr.mxu0 0.0
        %703 = vmatpush1.msra.mxu0 0.0
        %704 = vmatprep.subr.mxu0 0.0
        %705 = vmatpush1.msra.mxu0 0.0
        %706 = vmatprep.subr.mxu0 0.0
        %707 = vmatpush1.msra.mxu0 0.0
        %708 = vmatprep.subr.mxu0 0.0
        %709 = vmatpush1.msra.mxu0 0.0
        %710 = vmatprep.subr.mxu0 0.0
        %711 = vmatpush1.msra.mxu0 0.0
        %712 = vmatprep.subr.mxu0 0.0
        %713 = vmatpush1.msra.mxu0 0.0
        %714 = vmatprep.subr.mxu0 0.0
        %715 = vmatpush1.msra.mxu0 0.0
        %716 = vmatprep.mubr.f32.mxu0 0.0
        %717 = vmatmul.mubr.f32.gmra.mrb[0].mxu0 %v634
        %v718 = vpop.f32.mrb[0].mxu0
        %v719 = vadd.f32 0.0, %v718
        %v720 = vpop.f32.mrb[0].mxu0
        %721 = vmatprep.mubr.f32.mxu0 0.0
        %722 = vmatmul.mubr.f32.gmra.mrb[0].mxu0 %v635
        %v723 = vpop.f32.mrb[0].mxu0
        %v724 = vadd.f32 0.0, %v723
        %v725 = vpop.f32.mrb[0].mxu0
        %726 = vdwg.mxu0
        %v727 = vmul.f32 %v330, %v719
        %v728 = vmul.f32 %v331, %v724
        %729 = vst [vmem:[%s319] sm:$0xff] %v727
        %730 = vst [vmem:[%s319 + $0x8] sm:$0xff] %v728
        %s731 = sand.u32 %s164, 1
        %s732 = scalar_lea.sflag [#allocation4], %s731
        %s733 = sand.u32 %s164, 1
        %s734 = smul.addr %s733, 16
        %s735 = scalar_lea.vmem [#allocation10], %s734
        // Predicated region
        $region61: #{tpu_custom_call.1} parent=43 // pred_check
          %p736 = pneg %p174
        $region62: #{tpu_custom_call.1} parent=43 // pred_check_branch
          %738 = sbr.rel (%p736) target = $region64
        $region63: #{tpu_custom_call.1} parent=43 // pred_region
          %s739 = smul.u32 2, %s25
          %s740 = ssub.s32 3, %s739
          %p741 = scmp.lt.s32.totalorder %s740, 2
          %s742 = scalar_select %p741, %s740, 2
          %s743 = smul.u32 128, %s742
          %s745 = ssub.s32 256, %s743
          %746 = vsyncadd %s732, %s745
          %p747 = scmp.ne.s32.totalorder 0, %s743
          %s748 = smul.addr %s739, 128
          %s749 = scalar_lea.hbm %s6, %s748
          %s750 = smul.u32 8, %s742
          %s751 = sshll.u32 %s735, 4
          %s752 = int_to_ptr.vmem [resolvable:$true] %s751
          %s753 = sshll.u32 %s750, 4
          %757 = dma.vmem_to_hbm [thread:$0]  (%p747), %s752, %s753, %s749, %s732, 128, 128, 8
        $region64: #{tpu_custom_call.1} parent=43 // pred_fallthru
          _
      $region44: #{tpu_custom_call.1} parent=5 // pred_fallthru
        _
      %p758 = scmp.le.s32.totalorder 2, %s20
      // Predicated region
      $region65: #{tpu_custom_call.1} parent=5 // pred_check
        %p759 = pneg %p758
      $region66: #{tpu_custom_call.1} parent=5 // pred_check_branch
        %761 = sbr.rel (%p759) target = $region68
      $region67: #{tpu_custom_call.1} parent=5 // pred_region
        %s762 = ssub.s32 %s20, 2
        // Predicated region
        $region69: #{tpu_custom_call.1} parent=67 // pred_check
          %p763 = pneg %p180
        $region70: #{tpu_custom_call.1} parent=67 // pred_check_branch
          %765 = sbr.rel (%p763) target = $region72
        $region71: #{tpu_custom_call.1} parent=67 // pred_region
          %s766 = sand.u32 %s165, 1
          %s767 = scalar_lea.sflag [#allocation4], %s766
          %s768 = sand.u32 %s165, 1
          %s769 = smul.addr %s768, 16
          %s770 = scalar_lea.vmem [#allocation10], %s769
          %771 = dma.done %s767, 256
        $region72: #{tpu_custom_call.1} parent=67 // pred_fallthru
          _
      $region68: #{tpu_custom_call.1} parent=5 // pred_fallthru
        _
    $region6: #{tpu_custom_call.1} parent=1 // loop_footer
      %s24 = sadd.s32 1, %s20
    $region7: #{tpu_custom_call.1} parent=1 // loop_footer_branch
      %19 = sbr.rel target = $region3
    $region8: #{tpu_custom_call.1} parent=1 // loop_exit
      _
    %772 = vsyncpa [#allocation3], 1
    %s773 = scalar_lea.sflag [#allocation3], 1
    %774 = vsyncpa %s773, 1
    %775 = vsyncpa [#allocation6], 1
    %776 = vsyncpa [#allocation9], 1
    %777 = vsyncpa [#allocation4], 1
    %s778 = scalar_lea.sflag [#allocation4], 1
    %779 = vsyncpa %s778, 1

</llo_original>
